<compile_context>
chip_gen: v7x
topology: tpu7x:2x2x1
jax: 0.10.0
libtpu: 0.0.40
codegen_flags: <defaults>
</compile_context>

<pallas_src>
import functools

import jax
import jax.numpy as jnp
from jax import lax
from jax.experimental import pallas as pl
from jax.experimental.pallas import tpu as pltpu


def _ce_kernel(logits_ref, targets_ref, out_ref, *, hw, tile):
    """One (b, tile) step: write sum over columns of logsumexp(x) - x[target]."""
    t_idx = pl.program_id(1)

    x = logits_ref[...].astype(jnp.float32)              # (C, T) f32
    tgt = targets_ref[...]                                # (1, T) int32
    c, t = x.shape

    # numerically stable: shifted = x - max, reused for exp and target pick
    m = jnp.max(x, axis=0, keepdims=True)                 # (1, T)
    shifted = x - m                                       # (C, T)
    e = jnp.exp(shifted)                                  # (C, T) EUP
    lse0 = jnp.log(jnp.sum(e, axis=0, keepdims=True))     # (1, T)

    # pick shifted[target] via select + sublane sum (exactly one hit per col)
    cls = lax.broadcasted_iota(jnp.int32, (c, t), 0)
    picked = jnp.sum(jnp.where(cls == tgt, shifted, 0.0),
                     axis=0, keepdims=True)               # (1, T)

    loss = lse0 - picked                                  # (1, T) f32

    if hw % tile != 0:
        # only the last tile has out-of-range tail columns; mask them there
        # (keep the mask adjacent to the reduction so garbage never enters it)
        last = pl.num_programs(1) - 1

        @pl.when(t_idx != last)
        def _():
            out_ref[...] = jnp.sum(loss, keepdims=True)   # (1, 1)

        @pl.when(t_idx == last)
        def _():
            col = t_idx * tile + lax.broadcasted_iota(jnp.int32, (1, t), 1)
            out_ref[...] = jnp.sum(jnp.where(col < hw, loss, 0.0),
                                   keepdims=True)         # (1, 1)
    else:
        out_ref[...] = jnp.sum(loss, keepdims=True)       # (1, 1)


def _pick_tile(hw, c, itemsize, batch):
    """Lane tile along the pixel axis.

    Targets ~2 MiB of useful HBM bytes per grid step, under a ~20 MiB
    double-buffered VMEM working set (accounting for sublane padding of the
    class axis and the 8-sublane padding of the int32 targets row), and keeps
    enough grid steps for the pipeline to prefetch against.
    """
    # sublane pack factor: f32 -> 8, bf16/fp16 -> 16, int8/fp8 -> 32
    pack = max(8, 32 // max(1, itemsize))
    c_pad = -(-c // pack) * pack

    dma_col = c * itemsize + 4                      # HBM bytes per pixel col
    vmem_col = 2 * (c_pad * itemsize + 8 * 4)       # double-buffered VMEM/col

    tile_budget = (2 << 20) // dma_col              # ~2 MiB HBM per step
    tile_vmem = (20 << 20) // max(1, vmem_col)      # ~20 MiB working set cap
    tile = max(128, (min(tile_budget, tile_vmem) // 128) * 128)

    if hw <= tile:
        return hw                                   # full-axis block is legal

    # keep >= a few steps per batch element so the pipeline has work queued
    min_tiles = max(2, 8 // max(1, batch))
    per_tile = -(-hw // min_tiles)                  # cdiv
    per_tile = -(-per_tile // 128) * 128            # round up to lane multiple
    per_tile = max(512, per_tile)
    return max(128, min(tile, per_tile))


@jax.jit
def cross_entropy_loss(preds, targets, mask=None):
    """preds: (B, C, H, W) float logits; targets: (B, H, W) int class ids.

    Returns dict(loss=<scalar mean cross entropy>) matching
    nn.CrossEntropyLoss()(preds, targets). `mask` is accepted and ignored,
    exactly as in the reference module.
    """
    del mask
    B, C, H, W = preds.shape
    HW = H * W
    M = B * HW
    itemsize = preds.dtype.itemsize

    # free, contiguous reshapes only (no transpose / pad / extra HBM pass)
    logits = preds.reshape(B, C, HW)
    tgt = targets.reshape(B, 1, HW).astype(jnp.int32)

    tile = _pick_tile(HW, C, itemsize, B)
    n_tiles = pl.cdiv(HW, tile)

    kernel = functools.partial(_ce_kernel, hw=HW, tile=tile)

    cost = pl.CostEstimate(
        flops=6 * B * C * HW,
        transcendentals=B * C * HW,
        bytes_accessed=B * C * HW * itemsize + B * HW * 4 + B * n_tiles * 4,
    )

    partials = pl.pallas_call(
        kernel,
        out_shape=jax.ShapeDtypeStruct((B, n_tiles, 1, 1), jnp.float32),
        grid_spec=pltpu.PrefetchScalarGridSpec(
            num_scalar_prefetch=0,
            grid=(B, n_tiles),
            in_specs=[
                pl.BlockSpec((None, C, tile), lambda b, t: (b, 0, t)),
                pl.BlockSpec((None, 1, tile), lambda b, t: (b, 0, t)),
            ],
            out_specs=pl.BlockSpec((None, None, 1, 1),
                                   lambda b, t: (b, t, 0, 0)),
        ),
        compiler_params=pltpu.CompilerParams(
            dimension_semantics=("parallel", "parallel"),
            vmem_limit_bytes=32 << 20,
        ),
        cost_estimate=cost,
    )(logits, tgt)

    loss = (jnp.sum(partials) / jnp.float32(M)).astype(preds.dtype)
    return dict(loss=loss)


def _reference(preds, targets):
    """Plain-JAX reference of nn.CrossEntropyLoss (mean reduction)."""
    B, C, H, W = preds.shape
    logits = jnp.transpose(preds, (0, 2, 3, 1)).reshape(-1, C).astype(jnp.float32)
    t = targets.reshape(-1)
    logp = jax.nn.log_softmax(logits, axis=-1)
    nll = -jnp.take_along_axis(logp, t[:, None], axis=-1)[:, 0]
    return jnp.mean(nll)


if __name__ == "__main__":
    key = jax.random.PRNGKey(0)
    k1, k2 = jax.random.split(key)

    B, C, H, W = 2, 4, 16, 16
    preds = jax.random.normal(k1, (B, C, H, W), dtype=jnp.float32)
    targets = jax.random.randint(k2, (B, H, W), 0, C, dtype=jnp.int32)

    out = cross_entropy_loss(preds, targets)
    loss = jax.block_until_ready(out["loss"])

    ref = _reference(preds, targets)
    assert jnp.allclose(loss, ref, rtol=1e-5, atol=1e-5), (loss, ref)

    print("KERNEL_OK")
</pallas_src>

<mosaic_0001>
module attributes {stable_mosaic.version = 11 : i64} {
  func.func @_ce_kernel(%arg0: i32, %arg1: i32, %arg2: memref<1x4x256xf32, #tpu.memory_space<vmem>>, %arg3: memref<1x1x256xi32, #tpu.memory_space<vmem>>, %arg4: memref<1x1x1x1xf32, #tpu.memory_space<vmem>>) attributes {dimension_semantics = [#tpu.dimension_semantics<parallel>, #tpu.dimension_semantics<parallel>], iteration_bounds = array<i64: 2, 1>, scalar_prefetch = 0 : i64, scratch_operands = 0 : i64, tpu.core_type = #tpu.core_type<tc>, window_params = [{transform_indices = @transform_0, window_bounds = array<i64: 1, 4, 256>}, {transform_indices = @transform_1, window_bounds = array<i64: 1, 1, 256>}, {transform_indices = @transform_2, window_bounds = array<i64: 1, 1, 1, 1>}]} {
    %c0 = arith.constant 0 : index
    %c0_0 = arith.constant 0 : index
    %c0_1 = arith.constant 0 : index
    %0 = vector.load %arg2[%c0, %c0_0, %c0_1] : memref<1x4x256xf32, #tpu.memory_space<vmem>>, vector<1x4x256xf32>
    %1 = vector.shape_cast %0 : vector<1x4x256xf32> to vector<4x256xf32>
    %c0_2 = arith.constant 0 : index
    %c0_3 = arith.constant 0 : index
    %c0_4 = arith.constant 0 : index
    %2 = vector.load %arg3[%c0_2, %c0_3, %c0_4] : memref<1x1x256xi32, #tpu.memory_space<vmem>>, vector<1x1x256xi32>
    %3 = vector.shape_cast %2 : vector<1x1x256xi32> to vector<1x256xi32>
    %cst = arith.constant dense<0xFF800000> : vector<256xf32>
    %4 = vector.multi_reduction <maximumf>, %1, %cst [0] : vector<4x256xf32> to vector<256xf32>
    %5 = vector.shape_cast %4 : vector<256xf32> to vector<1x256xf32>
    %6 = vector.broadcast %5 : vector<1x256xf32> to vector<4x256xf32>
    %7 = arith.subf %1, %6 : vector<4x256xf32>
    %8 = math.exp %7 : vector<4x256xf32>
    %cst_5 = arith.constant dense<0.000000e+00> : vector<256xf32>
    %9 = vector.multi_reduction <add>, %8, %cst_5 [0] : vector<4x256xf32> to vector<256xf32>
    %10 = vector.shape_cast %9 : vector<256xf32> to vector<1x256xf32>
    %11 = math.log %10 : vector<1x256xf32>
    %12 = tpu.iota {dimensions = array<i32: 0>} : vector<4x256xi32>
    %13 = vector.broadcast %3 : vector<1x256xi32> to vector<4x256xi32>
    %14 = arith.cmpi eq, %12, %13 : vector<4x256xi32>
    %cst_6 = arith.constant 0.000000e+00 : f32
    %15 = vector.broadcast %cst_6 : f32 to vector<4x256xf32>
    %16 = arith.select %14, %7, %15 : vector<4x256xi1>, vector<4x256xf32>
    %cst_7 = arith.constant dense<0.000000e+00> : vector<256xf32>
    %17 = vector.multi_reduction <add>, %16, %cst_7 [0] : vector<4x256xf32> to vector<256xf32>
    %18 = vector.shape_cast %17 : vector<256xf32> to vector<1x256xf32>
    %19 = arith.subf %11, %18 : vector<1x256xf32>
    %20 = vector.shape_cast %19 : vector<1x256xf32> to vector<1x1x256xf32>
    %cst_8 = arith.constant dense<0.000000e+00> : vector<1xf32>
    %21 = vector.multi_reduction <add>, %20, %cst_8 [1, 2] : vector<1x1x256xf32> to vector<1xf32>
    %22 = vector.shape_cast %21 : vector<1xf32> to vector<1x1x1xf32>
    %23 = vector.extract %22[0, 0, 0] : f32 from vector<1x1x1xf32>
    %24 = vector.broadcast %23 : f32 to vector<1x1xf32>
    %c0_9 = arith.constant 0 : index
    %c0_10 = arith.constant 0 : index
    %c0_11 = arith.constant 0 : index
    %c0_12 = arith.constant 0 : index
    %25 = vector.load %arg4[%c0_9, %c0_10, %c0_11, %c0_12] : memref<1x1x1x1xf32, #tpu.memory_space<vmem>>, vector<1x1x1x1xf32>
    %26 = vector.shape_cast %25 : vector<1x1x1x1xf32> to vector<1x1xf32>
    %27 = vector.shape_cast %24 : vector<1x1xf32> to vector<1x1x1x1xf32>
    tpu.vector_store %arg4[%c0_9, %c0_10, %c0_11, %c0_12], %27 {strides = array<i32>} : memref<1x1x1x1xf32, #tpu.memory_space<vmem>>, vector<1x1x1x1xf32>,
    return
  }
  func.func @transform_0(%arg0: i32, %arg1: i32) -> (i32, i32, i32) {
    %c0_i32 = arith.constant 0 : i32
    %c0_i32_0 = arith.constant 0 : i32
    return %arg0, %c0_i32, %arg1 : i32, i32, i32
  }
  func.func @transform_1(%arg0: i32, %arg1: i32) -> (i32, i32, i32) {
    %c0_i32 = arith.constant 0 : i32
    %c0_i32_0 = arith.constant 0 : i32
    return %arg0, %c0_i32, %arg1 : i32, i32, i32
  }
  func.func @transform_2(%arg0: i32, %arg1: i32) -> (i32, i32, i32, i32) {
    %c0_i32 = arith.constant 0 : i32
    %c0_i32_0 = arith.constant 0 : i32
    %c0_i32_1 = arith.constant 0 : i32
    return %arg0, %arg1, %c0_i32, %c0_i32_0 : i32, i32, i32, i32
  }
}

</mosaic_0001>

<llo_original>
// kernel: cross_entropy_loss.1
$region0: #{cross_entropy_loss.1}
  #allocation0 [shape = 'u32[]', space=smem, size = 0x4, offset = 0x4, fixed_abs, tag = 'smem constant byte address 0x4 - core index']
  #allocation1 [shape = 'u32[144,128]{1,0:T(1,128)}', space=vmem, size = 0x12000, scoped, tag = 'internal scratch']
  %s0 = inlined_call_operand.vmem [shape: f32[2,4,256], index: 0, kind: input, shape index: {}]
  %s1 = inlined_call_operand.vmem [shape: s32[2,1,256], index: 1, kind: input, shape index: {}]
  %s2 = inlined_call_operand.vmem [shape: f32[2,1,1,1], index: 2, kind: output, shape index: {}]
  %s3 = sld [smem:[#allocation0]]
  $region41: #{cross_entropy_loss.1} parent=0
    _
  %s5 = ssub.s32 1, %s3
  %s6 = scalar_select 0, %s5, %s3
  loop: start=0, step=1, limit=4
  $region2: #{cross_entropy_loss.1} parent=0 // loop_pre_header
    _
  $region3: #{cross_entropy_loss.1} parent=0 // loop_header
    %s8 = sphi 0, %s12
    %p9 = scmp.ge.s32.totalorder %s8, 4
    %s15 = sphi 0, %s27
    %s16 = sphi 0, %s23
    %s17 = sphi 0, %s15
    %s18 = sphi 0, %s16
    %s19 = sphi 0, %s17
    %s20 = sphi 0, %s18
    %s32 = sphi 0, %s34
    %s35 = sphi 0, %s32
    %s36 = sphi 0, %s35
    %s52 = sphi 0, %s36
    %s60 = sphi 0, %s62
    %s63 = sphi 0, %s60
    %s64 = sphi 0, %s63
    %s80 = sphi 0, %s64
    %s88 = sphi 0, %s90
    %s91 = sphi 0, %s88
    %s92 = sphi 0, %s91
    %s108 = sphi 0, %s92
  $region4: #{cross_entropy_loss.1} parent=0 // loop_header_branch
    %11 = sbr.rel (%p9) target = $region8
  $region5: #{cross_entropy_loss.1} parent=0 // loop_body
    %s13 = ssub.s32 %s8, 1
    %s14 = ssub.s32 %s8, 2
    %s21 = sadd.s32 1, %s16
    %p22 = scmp.ge.s32.totalorder %s21, 1
    %s23 = scalar_select %p22, 0, %s21
    %s24 = sadd.s32 1, %s15
    %s25 = scalar_select %p22, %s24, %s15
    %p26 = scmp.ge.s32.totalorder %s25, 2
    %s27 = scalar_select %p26, 0, %s25
    %s28 = ssub.s32 %s15, %s27
    %s29 = ssub.s32 %s16, %s23
    %s30 = sor.u32 %s28, %s29
    %p31 = scmp.eq.s32.totalorder %s30, 0
    %s33 = sadd.s32 %s32, 1
    %s34 = scalar_select %p31, %s32, %s33
    %p37 = pneg %p31
    %p38 = scmp.eq.s32.totalorder %s8, 1
    %p39 = por %p37, %p38
    %p40 = scmp.ne.s32.totalorder %s32, %s35
    %p41 = scmp.eq.s32.totalorder %s8, 0
    %p42 = por %p40, %p41
    %p43 = scmp.ne.s32.totalorder %s32, %s35
    %p44 = scmp.eq.s32.totalorder %s13, 1
    %p45 = por %p43, %p44
    %p46 = scmp.ne.s32.totalorder %s35, %s36
    %p47 = scmp.eq.s32.totalorder %s13, 0
    %p48 = por %p46, %p47
    %p49 = scmp.ne.s32.totalorder %s35, %s36
    %p50 = scmp.eq.s32.totalorder %s14, 1
    %p51 = por %p49, %p50
    %p53 = scmp.ne.s32.totalorder %s36, %s52
    %p54 = scmp.eq.s32.totalorder %s14, 0
    %p55 = por %p53, %p54
    %s56 = ssub.s32 %s15, %s27
    %s57 = ssub.s32 %s16, %s23
    %s58 = sor.u32 %s56, %s57
    %p59 = scmp.eq.s32.totalorder %s58, 0
    %s61 = sadd.s32 %s60, 1
    %s62 = scalar_select %p59, %s60, %s61
    %p65 = pneg %p59
    %p66 = scmp.eq.s32.totalorder %s8, 1
    %p67 = por %p65, %p66
    %p68 = scmp.ne.s32.totalorder %s60, %s63
    %p69 = scmp.eq.s32.totalorder %s8, 0
    %p70 = por %p68, %p69
    %p71 = scmp.ne.s32.totalorder %s60, %s63
    %p72 = scmp.eq.s32.totalorder %s13, 1
    %p73 = por %p71, %p72
    %p74 = scmp.ne.s32.totalorder %s63, %s64
    %p75 = scmp.eq.s32.totalorder %s13, 0
    %p76 = por %p74, %p75
    %p77 = scmp.ne.s32.totalorder %s63, %s64
    %p78 = scmp.eq.s32.totalorder %s14, 1
    %p79 = por %p77, %p78
    %p81 = scmp.ne.s32.totalorder %s64, %s80
    %p82 = scmp.eq.s32.totalorder %s14, 0
    %p83 = por %p81, %p82
    %s84 = ssub.s32 %s15, %s27
    %s85 = ssub.s32 %s16, %s23
    %s86 = sor.u32 %s84, %s85
    %p87 = scmp.eq.s32.totalorder %s86, 0
    %s89 = sadd.s32 %s88, 1
    %s90 = scalar_select %p87, %s88, %s89
    %p93 = pneg %p87
    %p94 = scmp.eq.s32.totalorder %s8, 1
    %p95 = por %p93, %p94
    %p96 = scmp.ne.s32.totalorder %s88, %s91
    %p97 = scmp.eq.s32.totalorder %s8, 0
    %p98 = por %p96, %p97
    %p99 = scmp.ne.s32.totalorder %s88, %s91
    %p100 = scmp.eq.s32.totalorder %s13, 1
    %p101 = por %p99, %p100
    %p102 = scmp.ne.s32.totalorder %s91, %s92
    %p103 = scmp.eq.s32.totalorder %s13, 0
    %p104 = por %p102, %p103
    %p105 = scmp.ne.s32.totalorder %s91, %s92
    %p106 = scmp.eq.s32.totalorder %s14, 1
    %p107 = por %p105, %p106
    %p109 = scmp.ne.s32.totalorder %s92, %s108
    %p110 = scmp.eq.s32.totalorder %s14, 0
    %p111 = por %p109, %p110
    %p112 = scmp.le.s32.totalorder 1, %s8
    %p113 = scmp.lt.s32.totalorder %s8, 3
    %p114 = pnand %p112, %p113
    %p115 = pneg %p114
    // Predicated region
    $region9: #{cross_entropy_loss.1} parent=5 // pred_check
      _
    $region10: #{cross_entropy_loss.1} parent=5 // pred_check_branch
      %117 = sbr.rel (%p114) target = $region12
    $region11: #{cross_entropy_loss.1} parent=5 // pred_region
      %s118 = ssub.s32 %s8, 1
    $region12: #{cross_entropy_loss.1} parent=5 // pred_fallthru
      _
    %p119 = scmp.lt.s32.totalorder %s8, 2
    // Predicated region
    $region13: #{cross_entropy_loss.1} parent=5 // pred_check
      %p120 = pneg %p119
    $region14: #{cross_entropy_loss.1} parent=5 // pred_check_branch
      %122 = sbr.rel (%p120) target = $region16
    $region15: #{cross_entropy_loss.1} parent=5 // pred_region
      // Predicated region
      $region17: #{cross_entropy_loss.1} parent=15 // pred_check
        %p123 = pneg %p42
      $region18: #{cross_entropy_loss.1} parent=15 // pred_check_branch
        %125 = sbr.rel (%p123) target = $region20
      $region19: #{cross_entropy_loss.1} parent=15 // pred_region
        %s126 = smul.u32 2, %s16
        %p127 = scmp.lt.s32.totalorder %s15, 1
        %s128 = scalar_select %p127, %s15, 1
        %p129 = scmp.lt.s32.totalorder %s126, 1
        %s130 = scalar_select %p129, %s126, 1
        %s131 = smul.addr %s128, 2
        %s132 = sadd.s32 %s130, %s131
        %s133 = smul.addr %s132, 4
        %s134 = scalar_lea.vmem %s0, %s133
        %s135 = smul.u32 2, %s16
      $region20: #{cross_entropy_loss.1} parent=15 // pred_fallthru
        _
      // Predicated region
      $region21: #{cross_entropy_loss.1} parent=15 // pred_check
        %p136 = pneg %p70
      $region22: #{cross_entropy_loss.1} parent=15 // pred_check_branch
        %138 = sbr.rel (%p136) target = $region24
      $region23: #{cross_entropy_loss.1} parent=15 // pred_region
        %s139 = smul.u32 2, %s16
        %p140 = scmp.lt.s32.totalorder %s15, 1
        %s141 = scalar_select %p140, %s15, 1
        %p142 = scmp.lt.s32.totalorder %s139, 1
        %s143 = scalar_select %p142, %s139, 1
        %s144 = smul.addr %s141, 2
        %s145 = sadd.s32 %s143, %s144
        %s146 = scalar_lea.vmem %s1, %s145
        %s147 = smul.u32 2, %s16
      $region24: #{cross_entropy_loss.1} parent=15 // pred_fallthru
        _
    $region16: #{cross_entropy_loss.1} parent=5 // pred_fallthru
      _
    %p148 = scmp.le.s32.totalorder 1, %s8
    %p149 = scmp.lt.s32.totalorder %s8, 3
    %p150 = pnand %p148, %p149
    %p151 = pneg %p150
    // Predicated region
    $region25: #{cross_entropy_loss.1} parent=5 // pred_check
      _
    $region26: #{cross_entropy_loss.1} parent=5 // pred_check_branch
      %153 = sbr.rel (%p150) target = $region28
    $region27: #{cross_entropy_loss.1} parent=5 // pred_region
      %s154 = ssub.s32 %s8, 1
      %s155 = smul.u32 2, %s18
      %p156 = scmp.lt.s32.totalorder %s17, 1
      %s157 = scalar_select %p156, %s17, 1
      %p158 = scmp.lt.s32.totalorder %s155, 1
      %s159 = scalar_select %p158, %s155, 1
      %s160 = smul.addr %s157, 2
      %s161 = sadd.s32 %s159, %s160
      %s162 = smul.addr %s161, 4
      %s163 = scalar_lea.vmem %s0, %s162
      %p164 = pneg %p48
      %p165 = pneg %p45
      %s166 = smul.u32 2, %s18
      %p167 = scmp.lt.s32.totalorder %s17, 1
      %s168 = scalar_select %p167, %s17, 1
      %p169 = scmp.lt.s32.totalorder %s166, 1
      %s170 = scalar_select %p169, %s166, 1
      %s171 = smul.addr %s168, 2
      %s172 = sadd.s32 %s170, %s171
      %s173 = scalar_lea.vmem %s1, %s172
      %p174 = pneg %p76
      %p175 = pneg %p73
      %p176 = pneg %p104
      %p177 = pneg %p101
      %p178 = scmp.lt.s32.totalorder %s17, 1
      %s179 = scalar_select %p178, %s17, 1
      %p180 = scmp.lt.s32.totalorder %s18, 0
      %s181 = scalar_select %p180, %s18, 0
      %s182 = sadd.s32 %s181, %s179
      %s183 = scalar_lea.vmem %s2, %s182
      %s184 = smul.u32 2, %s18
      %p185 = scmp.lt.s32.totalorder %s17, 1
      %s186 = scalar_select %p185, %s17, 1
      %p187 = scmp.lt.s32.totalorder %s184, 1
      %s188 = scalar_select %p187, %s184, 1
      %s189 = smul.addr %s186, 2
      %s190 = sadd.s32 %s188, %s189
      %s191 = smul.addr %s190, 4
      %s192 = scalar_lea.vmem %s0, %s191
      %s193 = smul.u32 2, %s18
      %s194 = smul.u32 2, %s18
      %p195 = scmp.lt.s32.totalorder %s17, 1
      %s196 = scalar_select %p195, %s17, 1
      %p197 = scmp.lt.s32.totalorder %s194, 1
      %s198 = scalar_select %p197, %s194, 1
      %s199 = smul.addr %s196, 2
      %s200 = sadd.s32 %s198, %s199
      %s201 = scalar_lea.vmem %s1, %s200
      %s202 = smul.u32 2, %s18
      %p203 = scmp.lt.s32.totalorder %s17, 1
      %s204 = scalar_select %p203, %s17, 1
      %p205 = scmp.lt.s32.totalorder %s18, 0
      %s206 = scalar_select %p205, %s18, 0
      %s207 = sadd.s32 %s206, %s204
      %s208 = scalar_lea.vmem %s2, %s207
      %v209 = vld [vmem:[%s192] sm:$0xff]
      %v210 = vld [vmem:[%s201] sm:$0x3]
      %v212 = vcombine.high %v209, %v209
      %vm214 = vcmask 1043456
      %v215 = vsel %vm214, %v209, -inf
      %v216 = vrot.slane %v215, 4
      %v217 = vmax.f32 %v215, %v216
      %v218 = vrot.slane %v217, 2
      %v219 = vmax.f32 %v217, %v218
      %v220 = vrot.slane %v219, 1
      %v221 = vmax.f32 %v219, %v220
      %v222 = vsel %vm214, %v212, -inf
      %v223 = vrot.slane %v222, 4
      %v224 = vmax.f32 %v222, %v223
      %v225 = vrot.slane %v224, 2
      %v226 = vmax.f32 %v224, %v225
      %v227 = vrot.slane %v226, 1
      %v228 = vmax.f32 %v226, %v227
      %v231 = vcombine.low %v221, %v228
      %v233 = vsub.f32 %v209, %v231
      %v234 = vmul.f32 %v233, 1.442695
      %v235 = vpow.pop %v234
      %v237 = vcombine.high %v235, %v235
      %v239 = vsel %vm214, %v235, 0.0
      %v240 = vrot.slane %v239, 4
      %v241 = vadd.f32 %v239, %v240
      %v242 = vrot.slane %v241, 2
      %v243 = vadd.f32 %v241, %v242
      %v244 = vrot.slane %v243, 1
      %v245 = vadd.f32 %v243, %v244
      %v246 = vsel %vm214, %v237, 0.0
      %v247 = vrot.slane %v246, 4
      %v248 = vadd.f32 %v246, %v247
      %v249 = vrot.slane %v248, 2
      %v250 = vadd.f32 %v248, %v249
      %v251 = vrot.slane %v250, 1
      %v252 = vadd.f32 %v250, %v251
      %v253 = vlog2.pop %v245
      %v254 = vmul.f32 %v253, 0.6931472
      %v255 = vlog2.pop %v252
      %v256 = vmul.f32 %v255, 0.6931472
      %v257 = vlaneseq
      %v258 = vshrl.u32 %v257, 7
      %v259 = vlaneseq
      %v260 = vshrl.u32 %v259, 7
      %v261 = vsub.s32 0, %v260
      %v262 = vrot.slane %v210, %v261
      %v263 = vlaneseq
      %v264 = vshrl.u32 %v263, 7
      %v265 = vsub.s32 1, %v264
      %v266 = vrot.slane %v210, %v265
      %vm267 = vcmp.eq.s32.totalorder %v258, %v262
      %vm268 = vcmp.eq.s32.totalorder %v258, %v266
      %v270 = vcombine.high %v233, %v233
      %v272 = vsel %vm267, %v233, 0.0
      %v273 = vsel %vm268, %v270, 0.0
      %v274 = vsel %vm214, %v272, 0.0
      %v275 = vrot.slane %v274, 4
      %v276 = vadd.f32 %v274, %v275
      %v277 = vrot.slane %v276, 2
      %v278 = vadd.f32 %v276, %v277
      %v279 = vrot.slane %v278, 1
      %v280 = vadd.f32 %v278, %v279
      %v281 = vsel %vm214, %v273, 0.0
      %v282 = vrot.slane %v281, 4
      %v283 = vadd.f32 %v281, %v282
      %v284 = vrot.slane %v283, 2
      %v285 = vadd.f32 %v283, %v284
      %v286 = vrot.slane %v285, 1
      %v287 = vadd.f32 %v285, %v286
      %v288 = vsub.f32 %v254, %v280
      %v289 = vsub.f32 %v256, %v287
      %vm290 = vcmask 1040384
      %v291 = vsel %vm290, %v288, 0.0
      %v292 = vsel %vm290, %v289, 0.0
      %v293 = vadd.f32 %v291, %v292
      %294 = vadd.xlane.f32.xlu0 %v293
      %v295 = vpop.xlane.xlu0 %294
      %v296 = vrot.slane %v295, 4
      %v297 = vadd.f32 %v295, %v296
      %v298 = vrot.slane %v297, 2
      %v299 = vadd.f32 %v297, %v298
      %v300 = vrot.slane %v299, 1
      %v301 = vadd.f32 %v299, %v300
      %s302 = vtos %v301
      %v303 = vstv %s302
      %vm304 = vcmask 0
      %305 = vst.msk [vmem:[%s208] sm:$0x1] %vm304, %v303
      %p306 = scmp.lt.s32.totalorder %s17, 1
      %s307 = scalar_select %p306, %s17, 1
      %p308 = scmp.lt.s32.totalorder %s18, 0
      %s309 = scalar_select %p308, %s18, 0
      %s310 = sadd.s32 %s309, %s307
      %s311 = scalar_lea.vmem %s2, %s310
      // Predicated region
      $region29: #{cross_entropy_loss.1} parent=27 // pred_check
        %p312 = pneg %p101
      $region30: #{cross_entropy_loss.1} parent=27 // pred_check_branch
        %314 = sbr.rel (%p312) target = $region32
      $region31: #{cross_entropy_loss.1} parent=27 // pred_region
        _
      $region32: #{cross_entropy_loss.1} parent=27 // pred_fallthru
        _
    $region28: #{cross_entropy_loss.1} parent=5 // pred_fallthru
      _
    %p315 = scmp.le.s32.totalorder 2, %s8
    // Predicated region
    $region33: #{cross_entropy_loss.1} parent=5 // pred_check
      %p316 = pneg %p315
    $region34: #{cross_entropy_loss.1} parent=5 // pred_check_branch
      %318 = sbr.rel (%p316) target = $region36
    $region35: #{cross_entropy_loss.1} parent=5 // pred_region
      %s319 = ssub.s32 %s8, 2
      // Predicated region
      $region37: #{cross_entropy_loss.1} parent=35 // pred_check
        %p320 = pneg %p107
      $region38: #{cross_entropy_loss.1} parent=35 // pred_check_branch
        %322 = sbr.rel (%p320) target = $region40
      $region39: #{cross_entropy_loss.1} parent=35 // pred_region
        %p323 = scmp.lt.s32.totalorder %s19, 1
        %s324 = scalar_select %p323, %s19, 1
        %p325 = scmp.lt.s32.totalorder %s20, 0
        %s326 = scalar_select %p325, %s20, 0
        %s327 = sadd.s32 %s326, %s324
        %s328 = scalar_lea.vmem %s2, %s327
      $region40: #{cross_entropy_loss.1} parent=35 // pred_fallthru
        _
    $region36: #{cross_entropy_loss.1} parent=5 // pred_fallthru
      _
  $region6: #{cross_entropy_loss.1} parent=0 // loop_footer
    %s12 = sadd.s32 1, %s8
  $region7: #{cross_entropy_loss.1} parent=0 // loop_footer_branch
    %7 = sbr.rel target = $region3
  $region8: #{cross_entropy_loss.1} parent=0 // loop_exit
    _

</llo_original>
